<compile_context>
chip_gen: v7x
topology: tpu7x:2x2x1
jax: 0.10.0
libtpu: 0.0.40
codegen_flags: <defaults>
</compile_context>

<pallas_src>
import jax
import jax.numpy as jnp
from jax.experimental import pallas as pl
from jax.experimental.pallas import tpu as pltpu


def mlp_kernel(x_ref, w1_ref, b1_ref, w2_ref, b2_ref, o_ref):
    # x_ref:  (1, TB)   batch tile, lane-dense
    # w1_ref: (10, 1)   fc1 weight (hidden on sublanes)
    # b1_ref: (10, 1)   fc1 bias
    # w2_ref: (10, 1)   fc2 weight
    # b2_ref: (1, 1)    fc2 bias
    # o_ref:  (1, TB)
    x = x_ref[...]                                        # (1, TB)
    # fc1 with in_features == 1: just a broadcast multiply-add on the VPU (no MXU).
    h = w1_ref[...] * x + b1_ref[...]                     # (10, TB)
    h = jnp.maximum(h, 0.0)                               # ReLU
    # fc2 with out_features == 1: weighted sum over the 10 hidden features (sublane reduce).
    y = jnp.sum(h * w2_ref[...], axis=0, keepdims=True)   # (1, TB)
    o_ref[...] = (y + b2_ref[...]).astype(o_ref.dtype)


def _round_up(n: int, m: int) -> int:
    return ((n + m - 1) // m) * m


def simplenet_forward(x, fc1_w, fc1_b, fc2_w, fc2_b, *, block_b: int = 512 * 1024):
    """SimpleNet forward.

    x:      (B, 1) float32
    fc1_w:  (10, 1) float32   (PyTorch layout: [out_features, in_features])
    fc1_b:  (10,)   float32
    fc2_w:  (1, 10) float32
    fc2_b:  (1,)    float32
    block_b: batch tile width (lanes per grid step); clamped to a multiple of 128.
    Returns (B, 1) float32.
    """
    B = x.shape[0]

    # Lane-dense internal layout: batch on the lane axis.
    xt = x.astype(jnp.float32).reshape(1, B)              # (1, B)

    # Tile width: multiple of 128 lanes, no bigger than needed for small B.
    tb = min(block_b, _round_up(B, 128))
    tb = _round_up(tb, 128)
    b_pad = _round_up(B, tb)
    if b_pad != B:
        xt = jnp.pad(xt, ((0, 0), (0, b_pad - B)))
    grid = (b_pad // tb,)

    # Kernel-layout params: hidden dim on the sublane axis.
    w1 = fc1_w.astype(jnp.float32).reshape(10, 1)
    b1 = fc1_b.astype(jnp.float32).reshape(10, 1)
    w2 = fc2_w.astype(jnp.float32).reshape(10, 1)         # (1,10) -> (10,1)
    b2 = fc2_b.astype(jnp.float32).reshape(1, 1)

    const_w10 = pl.BlockSpec((10, 1), lambda i: (0, 0))   # resident across the batch grid
    const_b2 = pl.BlockSpec((1, 1), lambda i: (0, 0))

    out = pl.pallas_call(
        mlp_kernel,
        out_shape=jax.ShapeDtypeStruct((1, b_pad), jnp.float32),
        grid=grid,
        in_specs=[
            pl.BlockSpec((1, tb), lambda i: (0, i)),      # x stream
            const_w10,                                    # w1
            const_w10,                                    # b1
            const_w10,                                    # w2
            const_b2,                                     # b2
        ],
        out_specs=pl.BlockSpec((1, tb), lambda i: (0, i)),
        compiler_params=pltpu.CompilerParams(
            dimension_semantics=("parallel",),            # 2 TCs on v7x; harmless elsewhere
            vmem_limit_bytes=32 * 1024 * 1024,            # safe on v7x's smaller VMEM
        ),
    )(xt, w1, b1, w2, b2)

    # Back to the external (B, 1) contract.
    return out[0, :B].reshape(B, 1)


def init_params(key):
    """PyTorch-layout params with nn.Linear's default uniform(+/- 1/sqrt(fan_in)) init."""
    k1, k2, k3, k4 = jax.random.split(key, 4)
    bound1 = 1.0  # fc1 fan_in = 1
    fc1_w = jax.random.uniform(k1, (10, 1), jnp.float32, -bound1, bound1)
    fc1_b = jax.random.uniform(k2, (10,), jnp.float32, -bound1, bound1)
    bound2 = 1.0 / jnp.sqrt(10.0)  # fc2 fan_in = 10
    fc2_w = jax.random.uniform(k3, (1, 10), jnp.float32, -bound2, bound2)
    fc2_b = jax.random.uniform(k4, (1,), jnp.float32, -bound2, bound2)
    return fc1_w, fc1_b, fc2_w, fc2_b


if __name__ == "__main__":
    key = jax.random.PRNGKey(0)
    pkey, xkey = jax.random.split(key)
    fc1_w, fc1_b, fc2_w, fc2_b = init_params(pkey)

    # Small shapes; B is NOT a multiple of 128 and block_b=128 forces a multi-step grid,
    # exercising the lane-padding + tiled-grid path.
    B = 300
    x = jax.random.normal(xkey, (B, 1), jnp.float32)

    out = simplenet_forward(x, fc1_w, fc1_b, fc2_w, fc2_b, block_b=128)
    jax.block_until_ready(out)

    # Plain-JAX reference with PyTorch semantics: relu(x @ W1.T + b1) @ W2.T + b2.
    h_ref = jnp.maximum(x @ fc1_w.T + fc1_b, 0.0)
    ref = h_ref @ fc2_w.T + fc2_b

    assert out.shape == (B, 1)
    assert jnp.allclose(out, ref, atol=1e-5, rtol=1e-5)

    print("KERNEL_OK")
</pallas_src>

<mosaic_0001>
module attributes {stable_mosaic.version = 11 : i64} {
  func.func @mlp_kernel(%arg0: i32, %arg1: memref<1x128xf32, #tpu.memory_space<vmem>>, %arg2: memref<10x1xf32, #tpu.memory_space<vmem>>, %arg3: memref<10x1xf32, #tpu.memory_space<vmem>>, %arg4: memref<10x1xf32, #tpu.memory_space<vmem>>, %arg5: memref<1x1xf32, #tpu.memory_space<vmem>>, %arg6: memref<1x128xf32, #tpu.memory_space<vmem>>) attributes {dimension_semantics = [#tpu.dimension_semantics<parallel>], iteration_bounds = array<i64: 3>, scalar_prefetch = 0 : i64, scratch_operands = 0 : i64, tpu.core_type = #tpu.core_type<tc>, window_params = [{transform_indices = @transform_0, window_bounds = array<i64: 1, 128>}, {pipeline_mode = #tpu.pipeline_mode<synchronous>, transform_indices = @transform_1, window_bounds = array<i64: 10, 1>}, {pipeline_mode = #tpu.pipeline_mode<synchronous>, transform_indices = @transform_2, window_bounds = array<i64: 10, 1>}, {pipeline_mode = #tpu.pipeline_mode<synchronous>, transform_indices = @transform_3, window_bounds = array<i64: 10, 1>}, {pipeline_mode = #tpu.pipeline_mode<synchronous>, transform_indices = @transform_4, window_bounds = array<i64: 1, 1>}, {transform_indices = @transform_5, window_bounds = array<i64: 1, 128>}]} {
    %c0 = arith.constant 0 : index
    %c0_0 = arith.constant 0 : index
    %0 = vector.load %arg1[%c0, %c0_0] : memref<1x128xf32, #tpu.memory_space<vmem>>, vector<1x128xf32>
    %c0_1 = arith.constant 0 : index
    %c0_2 = arith.constant 0 : index
    %1 = vector.load %arg2[%c0_1, %c0_2] : memref<10x1xf32, #tpu.memory_space<vmem>>, vector<10x1xf32>
    %2 = vector.broadcast %1 : vector<10x1xf32> to vector<10x128xf32>
    %3 = vector.broadcast %0 : vector<1x128xf32> to vector<10x128xf32>
    %4 = arith.mulf %2, %3 : vector<10x128xf32>
    %c0_3 = arith.constant 0 : index
    %c0_4 = arith.constant 0 : index
    %5 = vector.load %arg3[%c0_3, %c0_4] : memref<10x1xf32, #tpu.memory_space<vmem>>, vector<10x1xf32>
    %6 = vector.broadcast %5 : vector<10x1xf32> to vector<10x128xf32>
    %7 = arith.addf %4, %6 : vector<10x128xf32>
    %cst = arith.constant 0.000000e+00 : f32
    %8 = vector.broadcast %cst : f32 to vector<10x128xf32>
    %9 = arith.maximumf %7, %8 : vector<10x128xf32>
    %c0_5 = arith.constant 0 : index
    %c0_6 = arith.constant 0 : index
    %10 = vector.load %arg4[%c0_5, %c0_6] : memref<10x1xf32, #tpu.memory_space<vmem>>, vector<10x1xf32>
    %11 = vector.broadcast %10 : vector<10x1xf32> to vector<10x128xf32>
    %12 = arith.mulf %9, %11 : vector<10x128xf32>
    %cst_7 = arith.constant dense<0.000000e+00> : vector<128xf32>
    %13 = vector.multi_reduction <add>, %12, %cst_7 [0] : vector<10x128xf32> to vector<128xf32>
    %14 = vector.shape_cast %13 : vector<128xf32> to vector<1x128xf32>
    %c0_8 = arith.constant 0 : index
    %c0_9 = arith.constant 0 : index
    %15 = vector.load %arg5[%c0_8, %c0_9] : memref<1x1xf32, #tpu.memory_space<vmem>>, vector<1x1xf32>
    %16 = vector.broadcast %15 : vector<1x1xf32> to vector<1x128xf32>
    %17 = arith.addf %14, %16 : vector<1x128xf32>
    %c0_10 = arith.constant 0 : index
    %c0_11 = arith.constant 0 : index
    %18 = vector.load %arg6[%c0_10, %c0_11] : memref<1x128xf32, #tpu.memory_space<vmem>>, vector<1x128xf32>
    tpu.vector_store %arg6[%c0_10, %c0_11], %17 {strides = array<i32>} : memref<1x128xf32, #tpu.memory_space<vmem>>, vector<1x128xf32>,
    return
  }
  func.func @transform_0(%arg0: i32) -> (i32, i32) {
    %c0_i32 = arith.constant 0 : i32
    %c0_i32_0 = arith.constant 0 : i32
    return %c0_i32, %arg0 : i32, i32
  }
  func.func @transform_1(%arg0: i32) -> (i32, i32) {
    %c0_i32 = arith.constant 0 : i32
    %c0_i32_0 = arith.constant 0 : i32
    %c0_i32_1 = arith.constant 0 : i32
    return %c0_i32, %c0_i32_0 : i32, i32
  }
  func.func @transform_2(%arg0: i32) -> (i32, i32) {
    %c0_i32 = arith.constant 0 : i32
    %c0_i32_0 = arith.constant 0 : i32
    %c0_i32_1 = arith.constant 0 : i32
    return %c0_i32, %c0_i32_0 : i32, i32
  }
  func.func @transform_3(%arg0: i32) -> (i32, i32) {
    %c0_i32 = arith.constant 0 : i32
    %c0_i32_0 = arith.constant 0 : i32
    %c0_i32_1 = arith.constant 0 : i32
    return %c0_i32, %c0_i32_0 : i32, i32
  }
  func.func @transform_4(%arg0: i32) -> (i32, i32) {
    %c0_i32 = arith.constant 0 : i32
    %c0_i32_0 = arith.constant 0 : i32
    %c0_i32_1 = arith.constant 0 : i32
    return %c0_i32, %c0_i32_0 : i32, i32
  }
  func.func @transform_5(%arg0: i32) -> (i32, i32) {
    %c0_i32 = arith.constant 0 : i32
    %c0_i32_0 = arith.constant 0 : i32
    return %c0_i32, %arg0 : i32, i32
  }
}

</mosaic_0001>

<llo_original>
// kernel: tpu_custom_call.1
$region0: #{tpu_custom_call.1}
  #allocation0 [shape = 'u32[]', space=smem, size = 0x4, offset = 0x4, fixed_abs, tag = 'smem constant byte address 0x4 - core index']
  #allocation1 [shape = 'u32[144,128]{1,0:T(1,128)}', space=vmem, size = 0x12000, scoped, tag = 'internal scratch']
  #allocation2 [shape = 'f32[1,1]{1,0:T(1,128)S(1)}', space=vmem, size = 0x200, scoped, tag = 'scoped memory for tpu_custom_call.1']
  %s0 = inlined_call_operand.vmem [shape: f32[1,384], index: 0, kind: input, shape index: {}]
  %s1 = inlined_call_operand.vmem [shape: f32[10,1], index: 1, kind: input, shape index: {}]
  %s2 = inlined_call_operand.vmem [shape: f32[10,1], index: 2, kind: input, shape index: {}]
  %s3 = inlined_call_operand.vmem [shape: f32[10,1], index: 3, kind: input, shape index: {}]
  %s4 = inlined_call_operand.<no memory space> [shape: f32[1,1], index: 4, kind: input, shape index: {}]
  %s5 = inlined_call_operand.hbm [shape: f32[1,384], index: 5, kind: output, shape index: {}]
  %s6 = sld [smem:[#allocation0]]
  $region53: #{tpu_custom_call.1} parent=0
    _
  %s8 = ssub.s32 1, %s6
  %s9 = scalar_select 0, %s8, %s6
  %v10 = vstv %s4
  %11 = vst [vmem:[#allocation2] sm:$0x1] %v10
  $region1: #{tpu_custom_call.1} parent=0
    #allocation3 [shape = 'u8[1024]{0}', space=vmem, size = 0x400, scoped, tag = 'output window, operand 0']
    #allocation4 [shape = 's32[2]{0}', space=sflag, size = 0x8, scoped, tag = 'scoped memory for tpu_custom_call.1']
    %12 = vsyncpa [#allocation4], 0
    %s13 = scalar_lea.sflag [#allocation4], 1
    %14 = vsyncpa %s13, 0
    loop: start=0, step=1, limit=5
    $region2: #{tpu_custom_call.1} parent=1 // loop_pre_header
      _
    $region3: #{tpu_custom_call.1} parent=1 // loop_header
      %s16 = sphi 0, %s20
      %p17 = scmp.ge.s32.totalorder %s16, 5
      %s26 = sphi 0, %s28
      %s29 = sphi 0, %s26
      %s30 = sphi 0, %s29
      %s46 = sphi 0, %s30
      %s50 = sphi 0, %s50
      %s52 = sphi 0, %s50
      %s53 = sphi 0, %s52
      %s67 = sphi 0, %s53
      %s71 = sphi 0, %s71
      %s73 = sphi 0, %s71
      %s74 = sphi 0, %s73
      %s88 = sphi 0, %s74
      %s92 = sphi 0, %s92
      %s94 = sphi 0, %s92
      %s95 = sphi 0, %s94
      %s109 = sphi 0, %s95
      %s113 = sphi 0, %s113
      %s115 = sphi 0, %s113
      %s116 = sphi 0, %s115
      %s130 = sphi 0, %s116
      %s136 = sphi 0, %s138
      %s139 = sphi 0, %s136
      %s140 = sphi 0, %s139
      %s156 = sphi 0, %s140
    $region4: #{tpu_custom_call.1} parent=1 // loop_header_branch
      %19 = sbr.rel (%p17) target = $region8
    $region5: #{tpu_custom_call.1} parent=1 // loop_body
      %s21 = ssub.s32 %s16, 1
      %s22 = ssub.s32 %s16, 2
      %s23 = sadd.s32 %s16, 1
      %s24 = ssub.s32 %s16, %s23
      %p25 = scmp.eq.s32.totalorder %s24, 0
      %s27 = sadd.s32 %s26, 1
      %s28 = scalar_select %p25, %s26, %s27
      %p31 = pneg %p25
      %p32 = scmp.eq.s32.totalorder %s16, 2
      %p33 = por %p31, %p32
      %p34 = scmp.ne.s32.totalorder %s26, %s29
      %p35 = scmp.eq.s32.totalorder %s16, 0
      %p36 = por %p34, %p35
      %p37 = scmp.ne.s32.totalorder %s26, %s29
      %p38 = scmp.eq.s32.totalorder %s21, 2
      %p39 = por %p37, %p38
      %p40 = scmp.ne.s32.totalorder %s29, %s30
      %p41 = scmp.eq.s32.totalorder %s21, 0
      %p42 = por %p40, %p41
      %p43 = scmp.ne.s32.totalorder %s29, %s30
      %p44 = scmp.eq.s32.totalorder %s22, 2
      %p45 = por %p43, %p44
      %p47 = scmp.ne.s32.totalorder %s30, %s46
      %p48 = scmp.eq.s32.totalorder %s22, 0
      %p49 = por %p47, %p48
      %s51 = sadd.s32 %s50, 1
      %p54 = scmp.eq.s32.totalorder %s16, 2
      %p55 = scmp.ne.s32.totalorder %s50, %s52
      %p56 = scmp.eq.s32.totalorder %s16, 0
      %p57 = por %p55, %p56
      %p58 = scmp.ne.s32.totalorder %s50, %s52
      %p59 = scmp.eq.s32.totalorder %s21, 2
      %p60 = por %p58, %p59
      %p61 = scmp.ne.s32.totalorder %s52, %s53
      %p62 = scmp.eq.s32.totalorder %s21, 0
      %p63 = por %p61, %p62
      %p64 = scmp.ne.s32.totalorder %s52, %s53
      %p65 = scmp.eq.s32.totalorder %s22, 2
      %p66 = por %p64, %p65
      %p68 = scmp.ne.s32.totalorder %s53, %s67
      %p69 = scmp.eq.s32.totalorder %s22, 0
      %p70 = por %p68, %p69
      %s72 = sadd.s32 %s71, 1
      %p75 = scmp.eq.s32.totalorder %s16, 2
      %p76 = scmp.ne.s32.totalorder %s71, %s73
      %p77 = scmp.eq.s32.totalorder %s16, 0
      %p78 = por %p76, %p77
      %p79 = scmp.ne.s32.totalorder %s71, %s73
      %p80 = scmp.eq.s32.totalorder %s21, 2
      %p81 = por %p79, %p80
      %p82 = scmp.ne.s32.totalorder %s73, %s74
      %p83 = scmp.eq.s32.totalorder %s21, 0
      %p84 = por %p82, %p83
      %p85 = scmp.ne.s32.totalorder %s73, %s74
      %p86 = scmp.eq.s32.totalorder %s22, 2
      %p87 = por %p85, %p86
      %p89 = scmp.ne.s32.totalorder %s74, %s88
      %p90 = scmp.eq.s32.totalorder %s22, 0
      %p91 = por %p89, %p90
      %s93 = sadd.s32 %s92, 1
      %p96 = scmp.eq.s32.totalorder %s16, 2
      %p97 = scmp.ne.s32.totalorder %s92, %s94
      %p98 = scmp.eq.s32.totalorder %s16, 0
      %p99 = por %p97, %p98
      %p100 = scmp.ne.s32.totalorder %s92, %s94
      %p101 = scmp.eq.s32.totalorder %s21, 2
      %p102 = por %p100, %p101
      %p103 = scmp.ne.s32.totalorder %s94, %s95
      %p104 = scmp.eq.s32.totalorder %s21, 0
      %p105 = por %p103, %p104
      %p106 = scmp.ne.s32.totalorder %s94, %s95
      %p107 = scmp.eq.s32.totalorder %s22, 2
      %p108 = por %p106, %p107
      %p110 = scmp.ne.s32.totalorder %s95, %s109
      %p111 = scmp.eq.s32.totalorder %s22, 0
      %p112 = por %p110, %p111
      %s114 = sadd.s32 %s113, 1
      %p117 = scmp.eq.s32.totalorder %s16, 2
      %p118 = scmp.ne.s32.totalorder %s113, %s115
      %p119 = scmp.eq.s32.totalorder %s16, 0
      %p120 = por %p118, %p119
      %p121 = scmp.ne.s32.totalorder %s113, %s115
      %p122 = scmp.eq.s32.totalorder %s21, 2
      %p123 = por %p121, %p122
      %p124 = scmp.ne.s32.totalorder %s115, %s116
      %p125 = scmp.eq.s32.totalorder %s21, 0
      %p126 = por %p124, %p125
      %p127 = scmp.ne.s32.totalorder %s115, %s116
      %p128 = scmp.eq.s32.totalorder %s22, 2
      %p129 = por %p127, %p128
      %p131 = scmp.ne.s32.totalorder %s116, %s130
      %p132 = scmp.eq.s32.totalorder %s22, 0
      %p133 = por %p131, %p132
      %s134 = ssub.s32 %s16, %s23
      %p135 = scmp.eq.s32.totalorder %s134, 0
      %s137 = sadd.s32 %s136, 1
      %s138 = scalar_select %p135, %s136, %s137
      %p141 = pneg %p135
      %p142 = scmp.eq.s32.totalorder %s16, 2
      %p143 = por %p141, %p142
      %p144 = scmp.ne.s32.totalorder %s136, %s139
      %p145 = scmp.eq.s32.totalorder %s16, 0
      %p146 = por %p144, %p145
      %p147 = scmp.ne.s32.totalorder %s136, %s139
      %p148 = scmp.eq.s32.totalorder %s21, 2
      %p149 = por %p147, %p148
      %p150 = scmp.ne.s32.totalorder %s139, %s140
      %p151 = scmp.eq.s32.totalorder %s21, 0
      %p152 = por %p150, %p151
      %p153 = scmp.ne.s32.totalorder %s139, %s140
      %p154 = scmp.eq.s32.totalorder %s22, 2
      %p155 = por %p153, %p154
      %p157 = scmp.ne.s32.totalorder %s140, %s156
      %p158 = scmp.eq.s32.totalorder %s22, 0
      %p159 = por %p157, %p158
      %p160 = scmp.le.s32.totalorder 1, %s16
      %p161 = scmp.lt.s32.totalorder %s16, 4
      %p162 = pnand %p160, %p161
      %p163 = pneg %p162
      // Predicated region
      $region9: #{tpu_custom_call.1} parent=5 // pred_check
        _
      $region10: #{tpu_custom_call.1} parent=5 // pred_check_branch
        %165 = sbr.rel (%p162) target = $region12
      $region11: #{tpu_custom_call.1} parent=5 // pred_region
        %s166 = ssub.s32 %s16, 1
        // Predicated region
        $region13: #{tpu_custom_call.1} parent=11 // pred_check
          %p167 = pneg %p63
        $region14: #{tpu_custom_call.1} parent=11 // pred_check_branch
          %169 = sbr.rel (%p167) target = $region16
        $region15: #{tpu_custom_call.1} parent=11 // pred_region
          _
        $region16: #{tpu_custom_call.1} parent=11 // pred_fallthru
          _
        // Predicated region
        $region17: #{tpu_custom_call.1} parent=11 // pred_check
          %p170 = pneg %p84
        $region18: #{tpu_custom_call.1} parent=11 // pred_check_branch
          %172 = sbr.rel (%p170) target = $region20
        $region19: #{tpu_custom_call.1} parent=11 // pred_region
          _
        $region20: #{tpu_custom_call.1} parent=11 // pred_fallthru
          _
        // Predicated region
        $region21: #{tpu_custom_call.1} parent=11 // pred_check
          %p173 = pneg %p105
        $region22: #{tpu_custom_call.1} parent=11 // pred_check_branch
          %175 = sbr.rel (%p173) target = $region24
        $region23: #{tpu_custom_call.1} parent=11 // pred_region
          _
        $region24: #{tpu_custom_call.1} parent=11 // pred_fallthru
          _
        // Predicated region
        $region25: #{tpu_custom_call.1} parent=11 // pred_check
          %p176 = pneg %p126
        $region26: #{tpu_custom_call.1} parent=11 // pred_check_branch
          %178 = sbr.rel (%p176) target = $region28
        $region27: #{tpu_custom_call.1} parent=11 // pred_region
          _
        $region28: #{tpu_custom_call.1} parent=11 // pred_fallthru
          _
      $region12: #{tpu_custom_call.1} parent=5 // pred_fallthru
        _
      %p179 = scmp.lt.s32.totalorder %s16, 3
      // Predicated region
      $region29: #{tpu_custom_call.1} parent=5 // pred_check
        %p180 = pneg %p179
      $region30: #{tpu_custom_call.1} parent=5 // pred_check_branch
        %182 = sbr.rel (%p180) target = $region32
      $region31: #{tpu_custom_call.1} parent=5 // pred_region
        // Predicated region
        $region33: #{tpu_custom_call.1} parent=31 // pred_check
          %p183 = pneg %p36
        $region34: #{tpu_custom_call.1} parent=31 // pred_check_branch
          %185 = sbr.rel (%p183) target = $region36
        $region35: #{tpu_custom_call.1} parent=31 // pred_region
          %p186 = scmp.lt.s32.totalorder %s16, 2
          %s187 = scalar_select %p186, %s16, 2
          %s188 = scalar_lea.vmem %s0, %s187
        $region36: #{tpu_custom_call.1} parent=31 // pred_fallthru
          _
      $region32: #{tpu_custom_call.1} parent=5 // pred_fallthru
        _
      %p189 = scmp.le.s32.totalorder 1, %s16
      %p190 = scmp.lt.s32.totalorder %s16, 4
      %p191 = pnand %p189, %p190
      %p192 = pneg %p191
      // Predicated region
      $region37: #{tpu_custom_call.1} parent=5 // pred_check
        _
      $region38: #{tpu_custom_call.1} parent=5 // pred_check_branch
        %194 = sbr.rel (%p191) target = $region40
      $region39: #{tpu_custom_call.1} parent=5 // pred_region
        %s195 = ssub.s32 %s16, 1
        %p196 = scmp.lt.s32.totalorder %s21, 2
        %s197 = scalar_select %p196, %s21, 2
        %s198 = scalar_lea.vmem %s0, %s197
        %p199 = pneg %p42
        %p200 = pneg %p39
        %p201 = pneg %p63
        %p202 = pneg %p60
        %p203 = pneg %p84
        %p204 = pneg %p81
        %p205 = pneg %p105
        %p206 = pneg %p102
        %p207 = pneg %p126
        %p208 = pneg %p123
        %p209 = pneg %p152
        %p210 = pneg %p149
        %s211 = sand.u32 %s139, 1
        %s212 = scalar_lea.sflag [#allocation4], %s211
        %s213 = sand.u32 %s139, 1
        %s214 = scalar_lea.vmem [#allocation3], %s213
        %p215 = scmp.lt.s32.totalorder %s21, 2
        %s216 = scalar_select %p215, %s21, 2
        %s217 = scalar_lea.vmem %s0, %s216
        %v218 = vld [vmem:[%s217] sm:$0x1]
        %v219 = vld [vmem:[%s1] sm:$0xff]
        %v220 = vld [vmem:[%s1 + $0x8] sm:$0x3]
        %222 = vset.pattern.permute.xlu0 0
        %223 = vperm.xlu0 %222, %v219
        %v224 = vpop.permute.xlu0 %223
        %227 = vset.pattern.permute.xlu0 0
        %228 = vperm.xlu0 %227, %v220
        %v229 = vpop.permute.xlu0 %228
        %v232 = vlaneseq
        %v233 = vshrl.u32 %v232, 7
        %v234 = vsub.s32 0, %v233
        %v235 = vrot.slane %v218, %v234
        %v237 = vmul.f32 %v224, %v235
        %v238 = vmul.f32 %v229, %v235
        %v239 = vld [vmem:[%s2] sm:$0xff]
        %v240 = vld [vmem:[%s2 + $0x8] sm:$0x3]
        %242 = vset.pattern.permute.xlu0 0
        %243 = vperm.xlu0 %242, %v239
        %v244 = vpop.permute.xlu0 %243
        %247 = vset.pattern.permute.xlu0 0
        %248 = vperm.xlu0 %247, %v240
        %v249 = vpop.permute.xlu0 %248
        %v251 = vadd.f32 %v237, %v244
        %v252 = vadd.f32 %v238, %v249
        %v253 = vmax.f32 %v251, 0.0
        %v254 = vmax.f32 %v252, 0.0
        %v255 = vld [vmem:[%s3] sm:$0xff]
        %v256 = vld [vmem:[%s3 + $0x8] sm:$0x3]
        %258 = vset.pattern.permute.xlu0 0
        %259 = vperm.xlu0 %258, %v255
        %v260 = vpop.permute.xlu0 %259
        %263 = vset.pattern.permute.xlu0 0
        %264 = vperm.xlu0 %263, %v256
        %v265 = vpop.permute.xlu0 %264
        %v267 = vmul.f32 %v253, %v260
        %v268 = vmul.f32 %v254, %v265
        %vm269 = vcmask 1041408
        %v270 = vsel %vm269, %v268, 0.0
        %v271 = vadd.f32 %v267, %v270
        %v272 = vrot.slane %v271, 4
        %v273 = vadd.f32 %v271, %v272
        %v274 = vrot.slane %v273, 2
        %v275 = vadd.f32 %v273, %v274
        %v276 = vrot.slane %v275, 1
        %v277 = vadd.f32 %v275, %v276
        %v278 = vld [vmem:[#allocation2] sm:$0x1]
        %280 = vset.pattern.permute.xlu0 0
        %281 = vperm.xlu0 %280, %v278
        %v282 = vpop.permute.xlu0 %281
        %v284 = vlaneseq
        %v285 = vshrl.u32 %v284, 7
        %v286 = vsub.s32 0, %v285
        %v287 = vrot.slane %v282, %v286
        %v288 = vadd.f32 %v277, %v287
        %289 = vst [vmem:[%s214] sm:$0x1] %v288
        %s290 = sand.u32 %s139, 1
        %s291 = scalar_lea.sflag [#allocation4], %s290
        %s292 = sand.u32 %s139, 1
        %s293 = scalar_lea.vmem [#allocation3], %s292
        // Predicated region
        $region41: #{tpu_custom_call.1} parent=39 // pred_check
          %p294 = pneg %p149
        $region42: #{tpu_custom_call.1} parent=39 // pred_check_branch
          %296 = sbr.rel (%p294) target = $region44
        $region43: #{tpu_custom_call.1} parent=39 // pred_region
          %s298 = ssub.s32 16, 16
          %299 = vsyncadd %s291, %s298
          %s300 = smul.addr %s21, 16
          %s301 = scalar_lea.hbm %s5, %s300
          %s303 = sshll.u32 %s293, 4
          %s304 = int_to_ptr.vmem [resolvable:$true] %s303
          %306 = dma.vmem_to_hbm [thread:$0]  %s304, 16, %s301, %s291
        $region44: #{tpu_custom_call.1} parent=39 // pred_fallthru
          _
      $region40: #{tpu_custom_call.1} parent=5 // pred_fallthru
        _
      %p307 = scmp.le.s32.totalorder 2, %s16
      // Predicated region
      $region45: #{tpu_custom_call.1} parent=5 // pred_check
        %p308 = pneg %p307
      $region46: #{tpu_custom_call.1} parent=5 // pred_check_branch
        %310 = sbr.rel (%p308) target = $region48
      $region47: #{tpu_custom_call.1} parent=5 // pred_region
        %s311 = ssub.s32 %s16, 2
        // Predicated region
        $region49: #{tpu_custom_call.1} parent=47 // pred_check
          %p312 = pneg %p155
        $region50: #{tpu_custom_call.1} parent=47 // pred_check_branch
          %314 = sbr.rel (%p312) target = $region52
        $region51: #{tpu_custom_call.1} parent=47 // pred_region
          %s315 = sand.u32 %s140, 1
          %s316 = scalar_lea.sflag [#allocation4], %s315
          %s317 = sand.u32 %s140, 1
          %s318 = scalar_lea.vmem [#allocation3], %s317
          %319 = dma.done %s316, 16
        $region52: #{tpu_custom_call.1} parent=47 // pred_fallthru
          _
      $region48: #{tpu_custom_call.1} parent=5 // pred_fallthru
        _
    $region6: #{tpu_custom_call.1} parent=1 // loop_footer
      %s20 = sadd.s32 1, %s16
    $region7: #{tpu_custom_call.1} parent=1 // loop_footer_branch
      %15 = sbr.rel target = $region3
    $region8: #{tpu_custom_call.1} parent=1 // loop_exit
      _
    %320 = vsyncpa [#allocation4], 1
    %s321 = scalar_lea.sflag [#allocation4], 1
    %322 = vsyncpa %s321, 1

</llo_original>
